<compile_context>
chip_gen: v7x
topology: tpu7x:2x2x1
jax: 0.10.0
libtpu: 0.0.40
codegen_flags: <defaults>
</compile_context>

<pallas_src>
import functools

import jax
import jax.numpy as jnp
from jax.experimental import pallas as pl
from jax.experimental.pallas import tpu as pltpu


def _round_up(x, m):
    return ((x + m - 1) // m) * m


def _pick_tile(dim, align, max_tile):
    """Pad `dim` to `align`, pick a tile <= max_tile, re-pad to a tile multiple."""
    padded = _round_up(dim, align)
    tile = min(padded, max_tile)
    padded = _round_up(padded, tile)
    return padded, tile


# --------------------------- single-block kernels (small shapes) -------------


def _single_linear_kernel(x_ref, wt_ref, b_ref, o_ref):
    """y = x @ W^T + b with W^T = (K, N); whole problem in one VMEM block."""
    o_ref[...] = (
        jnp.dot(x_ref[...], wt_ref[...], preferred_element_type=jnp.float32)
        + b_ref[...]
    ).astype(o_ref.dtype)


def _single_noise_kernel(sigma_ref, x_ref, wt_ref, nwt_ref, b_ref, nb_ref, o_ref):
    """y = x @ (W + sigma*nW)^T + (b + sigma*nb); single VMEM block."""
    sigma = sigma_ref[0]
    w_eff = wt_ref[...] + sigma * nwt_ref[...]           # (K, N)   VPU
    b_eff = b_ref[...] + sigma * nb_ref[...]             # (1, N)
    o_ref[...] = (
        jnp.dot(x_ref[...], w_eff, preferred_element_type=jnp.float32) + b_eff
    ).astype(o_ref.dtype)


# --------------------------- tiled kernels (large shapes) --------------------


def _tiled_linear_kernel(x_ref, wt_ref, b_ref, o_ref):
    """Accumulate directly into the resident f32 output block (no scratch)."""
    k = pl.program_id(2)

    @pl.when(k == 0)
    def _():
        o_ref[...] = jnp.zeros_like(o_ref)

    o_ref[...] += jnp.dot(x_ref[...], wt_ref[...],
                          preferred_element_type=jnp.float32)

    @pl.when(k == pl.num_programs(2) - 1)
    def _():
        o_ref[...] += b_ref[...]


def _tiled_noise_kernel(sigma_ref, x_ref, wt_ref, nwt_ref, b_ref, nb_ref, o_ref):
    k = pl.program_id(2)
    sigma = sigma_ref[0]

    @pl.when(k == 0)
    def _():
        o_ref[...] = jnp.zeros_like(o_ref)

    w_eff = wt_ref[...] + sigma * nwt_ref[...]            # (Kt, Nt)  VPU
    o_ref[...] += jnp.dot(x_ref[...], w_eff,              # (Bt, Nt)  MXU
                          preferred_element_type=jnp.float32)

    @pl.when(k == pl.num_programs(2) - 1)
    def _():
        o_ref[...] += b_ref[...] + sigma * nb_ref[...]    # (1, Nt)


# --------------------------- wrapper ----------------------------------------

_FAST_PATH_BYTES = 8 << 20          # whole-problem VMEM budget for single block
_VMEM_LIMIT_BYTES = 32 << 20        # safe on v5e (16 MiB default raised), v6e, v7x


def noise_linear(x, w_t, bias2d, noise_w_t=None, noise_b2d=None, sigma=0.0,
                 *, max_bt=512, max_nt=512, max_kt=512, force_tiled=False):
    """NoiseLinear forward.

    x:         (B, K) f32
    w_t:       (K, N) f32  -- weight stored pre-transposed at init
    bias2d:    (1, N) f32
    noise_w_t: (K, N) f32  (only read when sigma != 0)
    noise_b2d: (1, N) f32  (only read when sigma != 0)
    sigma:     Python float (0.0 is the module default and is specialized)
    """
    B, K = x.shape
    Kw, N = w_t.shape
    assert K == Kw

    # Trace-time specialization: sigma == 0.0 (module default) -> noise
    # tensors are dead work; never stream them from HBM.
    use_noise = not (isinstance(sigma, (int, float)) and float(sigma) == 0.0)

    f32 = jnp.float32
    out_dtype = f32

    n_streams = 2 if use_noise else 1
    footprint = 4 * (B * K + n_streams * K * N + n_streams * N + B * N)

    # ---------------- small-shape fast path: one block, no padding ----------
    if not force_tiled and footprint <= _FAST_PATH_BYTES:
        vmem = pl.BlockSpec(memory_space=pltpu.MemorySpace.VMEM)
        out_shape = jax.ShapeDtypeStruct((B, N), out_dtype)
        if use_noise:
            sigma_arr = jnp.asarray(sigma, dtype=f32).reshape(1)
            return pl.pallas_call(
                _single_noise_kernel,
                out_shape=out_shape,
                in_specs=[
                    pl.BlockSpec(memory_space=pltpu.MemorySpace.SMEM),  # sigma
                    vmem, vmem, vmem, vmem, vmem,
                ],
                out_specs=vmem,
            )(sigma_arr, x, w_t, noise_w_t, bias2d, noise_b2d)
        return pl.pallas_call(
            _single_linear_kernel,
            out_shape=out_shape,
            in_specs=[vmem, vmem, vmem],
            out_specs=vmem,
        )(x, w_t, bias2d)

    # ---------------- tiled path: (B, N, K) grid, K-last reduction ----------
    Bp, Bt = _pick_tile(B, 8, max_bt)
    Kp, Kt = _pick_tile(K, 128, max_kt)
    Np, Nt = _pick_tile(N, 128, max_nt)

    # Zero padding keeps results exact; for properly sized layers (multiples
    # of the tiles) these pads are no-ops.
    # TODO(synk): a real module would store the padded (Kp, Np) weight at init.
    x_p = x if (Bp == B and Kp == K) else jnp.pad(x, ((0, Bp - B), (0, Kp - K)))
    wT_p = w_t if (Kp == K and Np == N) else jnp.pad(
        w_t, ((0, Kp - K), (0, Np - N)))
    b_p = bias2d if Np == N else jnp.pad(bias2d, ((0, 0), (0, Np - N)))

    grid = (Bp // Bt, Np // Nt, Kp // Kt)
    out_shape = jax.ShapeDtypeStruct((Bp, Np), out_dtype)
    cparams = pltpu.CompilerParams(
        dimension_semantics=("parallel", "parallel", "arbitrary"),
        vmem_limit_bytes=_VMEM_LIMIT_BYTES,
    )

    if use_noise:
        nwT_p = noise_w_t if (Kp == K and Np == N) else jnp.pad(
            noise_w_t, ((0, Kp - K), (0, Np - N)))
        nb_p = noise_b2d if Np == N else jnp.pad(
            noise_b2d, ((0, 0), (0, Np - N)))
        sigma_arr = jnp.asarray(sigma, dtype=f32).reshape(1)

        grid_spec = pltpu.PrefetchScalarGridSpec(
            num_scalar_prefetch=1,
            grid=grid,
            in_specs=[
                pl.BlockSpec((Bt, Kt), lambda i, j, k, s: (i, k)),   # x
                pl.BlockSpec((Kt, Nt), lambda i, j, k, s: (k, j)),   # W^T
                pl.BlockSpec((Kt, Nt), lambda i, j, k, s: (k, j)),   # noise_w^T
                pl.BlockSpec((1, Nt), lambda i, j, k, s: (0, j)),    # bias
                pl.BlockSpec((1, Nt), lambda i, j, k, s: (0, j)),    # noise_b
            ],
            out_specs=pl.BlockSpec((Bt, Nt), lambda i, j, k, s: (i, j)),
        )
        out_p = pl.pallas_call(
            _tiled_noise_kernel,
            out_shape=out_shape,
            grid_spec=grid_spec,
            compiler_params=cparams,
        )(sigma_arr, x_p, wT_p, nwT_p, b_p, nb_p)
    else:
        grid_spec = pltpu.PrefetchScalarGridSpec(
            num_scalar_prefetch=0,
            grid=grid,
            in_specs=[
                pl.BlockSpec((Bt, Kt), lambda i, j, k: (i, k)),      # x
                pl.BlockSpec((Kt, Nt), lambda i, j, k: (k, j)),      # W^T
                pl.BlockSpec((1, Nt), lambda i, j, k: (0, j)),       # bias
            ],
            out_specs=pl.BlockSpec((Bt, Nt), lambda i, j, k: (i, j)),
        )
        out_p = pl.pallas_call(
            _tiled_linear_kernel,
            out_shape=out_shape,
            grid_spec=grid_spec,
            compiler_params=cparams,
        )(x_p, wT_p, b_p)

    if Bp == B and Np == N:
        return out_p
    return out_p[:B, :N]


# --------------------------- "module init" ----------------------------------


def init_noise_linear(key, in_size, out_size):
    """Mimics nn.Linear init; stores weight pre-transposed as (K, N)."""
    k_w, k_b = jax.random.split(key)
    bound = 1.0 / float(in_size) ** 0.5
    w_t = jax.random.uniform(k_w, (in_size, out_size), jnp.float32,
                             -bound, bound)          # (K, N) == W.T
    bias2d = jax.random.uniform(k_b, (1, out_size), jnp.float32, -bound, bound)
    return {"w_t": w_t, "bias2d": bias2d}


# --------------------------- self-test ---------------------------------------

if __name__ == "__main__":
    key = jax.random.PRNGKey(0)
    k_p, k_x, k_nw, k_nb = jax.random.split(key, 4)

    # DDPG NoiseLinear sizes.
    B, in_size, out_size = 8, 64, 32

    params = init_noise_linear(k_p, in_size, out_size)
    w_t, bias2d = params["w_t"], params["bias2d"]

    # Elementwise-i.i.d. standard-normal noise (randn_like in the module),
    # generated directly in the stored (K, N) / (1, N) layouts.
    noise_w_t = jax.random.normal(k_nw, (in_size, out_size), jnp.float32)
    noise_b2d = jax.random.normal(k_nb, (1, out_size), jnp.float32)

    x = jax.random.normal(k_x, (B, in_size), jnp.float32)

    # 1) Module default: sigma == 0.0 -> specialized fast-path kernel.
    out0 = jax.block_until_ready(noise_linear(x, w_t, bias2d, sigma=0.0))
    ref0 = x @ w_t + bias2d
    assert out0.shape == (B, out_size)
    assert jnp.allclose(out0, ref0, atol=1e-5, rtol=1e-5)

    # 2) Non-zero sigma: fast-path kernel with noise perturbation.
    sigma1 = 0.1
    out1 = jax.block_until_ready(
        noise_linear(x, w_t, bias2d, noise_w_t, noise_b2d, sigma1))
    ref1 = x @ (w_t + sigma1 * noise_w_t) + (bias2d + sigma1 * noise_b2d)
    assert out1.shape == (B, out_size)
    assert jnp.allclose(out1, ref1, atol=1e-5, rtol=1e-5)

    # 3) Tiled path (forced) at the same shape: exercises padding, the K-grid
    #    accumulation into the resident output block, and scalar prefetch.
    out2 = jax.block_until_ready(
        noise_linear(x, w_t, bias2d, noise_w_t, noise_b2d, sigma1,
                     force_tiled=True))
    assert out2.shape == (B, out_size)
    assert jnp.allclose(out2, ref1, atol=1e-5, rtol=1e-5)

    # 4) Larger layer exercising a multi-step K reduction on the tiled path.
    B2, K2, N2 = 16, 256, 256
    k2 = jax.random.PRNGKey(1)
    k_x2, k_w2, k_b2, k_nw2, k_nb2 = jax.random.split(k2, 5)
    x2 = jax.random.normal(k_x2, (B2, K2), jnp.float32)
    w_t2 = jax.random.normal(k_w2, (K2, N2), jnp.float32) * 0.05
    b2 = jax.random.normal(k_b2, (1, N2), jnp.float32) * 0.05
    nw2 = jax.random.normal(k_nw2, (K2, N2), jnp.float32)
    nb2 = jax.random.normal(k_nb2, (1, N2), jnp.float32)
    out3 = jax.block_until_ready(
        noise_linear(x2, w_t2, b2, nw2, nb2, sigma1,
                     force_tiled=True, max_kt=128))
    ref3 = x2 @ (w_t2 + sigma1 * nw2) + (b2 + sigma1 * nb2)
    assert out3.shape == (B2, N2)
    assert jnp.allclose(out3, ref3, atol=1e-4, rtol=1e-4)

    print("KERNEL_OK")
</pallas_src>

<mosaic_0001>
module attributes {stable_mosaic.version = 11 : i64} {
  func.func @_single_linear_kernel(%arg0: memref<8x64xf32, #tpu.memory_space<vmem>>, %arg1: memref<64x32xf32, #tpu.memory_space<vmem>>, %arg2: memref<1x32xf32, #tpu.memory_space<vmem>>, %arg3: memref<8x32xf32, #tpu.memory_space<vmem>>) attributes {dimension_semantics = [], scalar_prefetch = 0 : i64, scratch_operands = 0 : i64, tpu.core_type = #tpu.core_type<tc>} {
    %c0 = arith.constant 0 : index
    %c0_0 = arith.constant 0 : index
    %0 = vector.load %arg0[%c0, %c0_0] : memref<8x64xf32, #tpu.memory_space<vmem>>, vector<8x64xf32>
    %c0_1 = arith.constant 0 : index
    %c0_2 = arith.constant 0 : index
    %1 = vector.load %arg1[%c0_1, %c0_2] : memref<64x32xf32, #tpu.memory_space<vmem>>, vector<64x32xf32>
    %cst = arith.constant dense<0.000000e+00> : vector<8x32xf32>
    %2 = tpu.matmul %0, %1, %cst {dimension_numbers = #tpu.dot_dimension_numbers<[1], [0], [0], [1], [0, 0, 1, 1], [], []>} : vector<8x64xf32>, vector<64x32xf32>, vector<8x32xf32> -> vector<8x32xf32>
    %c0_3 = arith.constant 0 : index
    %c0_4 = arith.constant 0 : index
    %3 = vector.load %arg2[%c0_3, %c0_4] : memref<1x32xf32, #tpu.memory_space<vmem>>, vector<1x32xf32>
    %4 = vector.broadcast %3 : vector<1x32xf32> to vector<8x32xf32>
    %5 = arith.addf %2, %4 : vector<8x32xf32>
    %c0_5 = arith.constant 0 : index
    %c0_6 = arith.constant 0 : index
    %6 = vector.load %arg3[%c0_5, %c0_6] : memref<8x32xf32, #tpu.memory_space<vmem>>, vector<8x32xf32>
    tpu.vector_store %arg3[%c0_5, %c0_6], %5 {strides = array<i32>} : memref<8x32xf32, #tpu.memory_space<vmem>>, vector<8x32xf32>,
    return
  }
}

</mosaic_0001>

<llo_original>
// kernel: tpu_custom_call.1
$region0: #{tpu_custom_call.1}
  #allocation0 [shape = 'u32[]', space=smem, size = 0x4, offset = 0x4, fixed_abs, tag = 'smem constant byte address 0x4 - core index']
  #allocation1 [shape = 'u32[144,128]{1,0:T(1,128)}', space=vmem, size = 0x12000, scoped, tag = 'internal scratch']
  %s0 = inlined_call_operand.vmem [shape: f32[8,64], index: 0, kind: input, shape index: {}]
  %s1 = inlined_call_operand.vmem [shape: f32[64,32], index: 1, kind: input, shape index: {}]
  %s2 = inlined_call_operand.vmem [shape: f32[1,32], index: 2, kind: input, shape index: {}]
  %s3 = inlined_call_operand.hbm [shape: f32[8,32], index: 3, kind: output, shape index: {}]
  %s4 = sld [smem:[#allocation0]]
  $region22: #{tpu_custom_call.1} parent=0
    _
  %s6 = ssub.s32 1, %s4
  %s7 = scalar_select 0, %s6, %s4
  $region1: #{tpu_custom_call.1} parent=0
    #allocation2 [shape = 'u8[4096]{0}', space=vmem, size = 0x1000, scoped, tag = 'output window, operand 0, single buffered']
    #allocation3 [shape = 's32[1]{0}', space=sflag, size = 0x4, scoped, tag = 'scoped memory for tpu_custom_call.1']
    %8 = vsyncpa [#allocation3], 0
    // Predicated region
    $region2: #{tpu_custom_call.1} parent=1 // pred_check
      _
    $region3: #{tpu_custom_call.1} parent=1 // pred_check_branch
      %10 = sbr.rel (0) target = $region5
    $region4: #{tpu_custom_call.1} parent=1 // pred_region
      _
    $region5: #{tpu_custom_call.1} parent=1 // pred_fallthru
      _
    // Predicated region
    $region6: #{tpu_custom_call.1} parent=1 // pred_check
      _
    $region7: #{tpu_custom_call.1} parent=1 // pred_check_branch
      %12 = sbr.rel (0) target = $region9
    $region8: #{tpu_custom_call.1} parent=1 // pred_region
      _
    $region9: #{tpu_custom_call.1} parent=1 // pred_fallthru
      _
    // Predicated region
    $region10: #{tpu_custom_call.1} parent=1 // pred_check
      _
    $region11: #{tpu_custom_call.1} parent=1 // pred_check_branch
      %14 = sbr.rel (0) target = $region13
    $region12: #{tpu_custom_call.1} parent=1 // pred_region
      _
    $region13: #{tpu_custom_call.1} parent=1 // pred_fallthru
      _
    %v15 = vld [vmem:[%s0] sm:$0xff]
    %v16 = vld [vmem:[%s1] sm:$0xff]
    %v17 = vld [vmem:[%s1 + $0x8] sm:$0xff]
    %v18 = vld [vmem:[%s1 + $0x10] sm:$0xff]
    %v19 = vld [vmem:[%s1 + $0x18] sm:$0xff]
    %v20 = vld [vmem:[%s1 + $0x20] sm:$0xff]
    %v21 = vld [vmem:[%s1 + $0x28] sm:$0xff]
    %v22 = vld [vmem:[%s1 + $0x30] sm:$0xff]
    %v23 = vld [vmem:[%s1 + $0x38] sm:$0xff]
    %v24 = vld [vmem:[%s2] sm:$0x1]
    %v26 = vlaneseq
    %v27 = vshrl.u32 %v26, 7
    %v28 = vsub.s32 0, %v27
    %v29 = vrot.slane %v24, %v28
    %vm31 = vcmask 523264
    %v33 = vsel %vm31, %v15, 0
    %35 = vmatprep.subr.mxu0 0.0
    %36 = vmatpush1.msra.mxu0 %v16
    %37 = vmatprep.subr.mxu0 0.0
    %38 = vmatpush1.msra.mxu0 %v17
    %39 = vmatprep.subr.mxu0 0.0
    %40 = vmatpush1.msra.mxu0 %v18
    %41 = vmatprep.subr.mxu0 0.0
    %42 = vmatpush1.msra.mxu0 %v19
    %43 = vmatprep.subr.mxu0 0.0
    %44 = vmatpush1.msra.mxu0 %v20
    %45 = vmatprep.subr.mxu0 0.0
    %46 = vmatpush1.msra.mxu0 %v21
    %47 = vmatprep.subr.mxu0 0.0
    %48 = vmatpush1.msra.mxu0 %v22
    %49 = vmatprep.subr.mxu0 0.0
    %50 = vmatpush1.msra.mxu0 %v23
    %51 = vmatprep.subr.mxu0 0.0
    %52 = vmatpush1.msra.mxu0 0.0
    %53 = vmatprep.subr.mxu0 0.0
    %54 = vmatpush1.msra.mxu0 0.0
    %55 = vmatprep.subr.mxu0 0.0
    %56 = vmatpush1.msra.mxu0 0.0
    %57 = vmatprep.subr.mxu0 0.0
    %58 = vmatpush1.msra.mxu0 0.0
    %59 = vmatprep.subr.mxu0 0.0
    %60 = vmatpush1.msra.mxu0 0.0
    %61 = vmatprep.subr.mxu0 0.0
    %62 = vmatpush1.msra.mxu0 0.0
    %63 = vmatprep.subr.mxu0 0.0
    %64 = vmatpush1.msra.mxu0 0.0
    %65 = vmatprep.subr.mxu0 0.0
    %66 = vmatpush1.msra.mxu0 0.0
    %67 = vmatprep.subr.mxu0 0.0
    %68 = vmatpush1.msra.mxu0 0.0
    %69 = vmatprep.subr.mxu0 0.0
    %70 = vmatpush1.msra.mxu0 0.0
    %71 = vmatprep.subr.mxu0 0.0
    %72 = vmatpush1.msra.mxu0 0.0
    %73 = vmatprep.subr.mxu0 0.0
    %74 = vmatpush1.msra.mxu0 0.0
    %75 = vmatprep.subr.mxu0 0.0
    %76 = vmatpush1.msra.mxu0 0.0
    %77 = vmatprep.subr.mxu0 0.0
    %78 = vmatpush1.msra.mxu0 0.0
    %79 = vmatprep.subr.mxu0 0.0
    %80 = vmatpush1.msra.mxu0 0.0
    %81 = vmatprep.subr.mxu0 0.0
    %82 = vmatpush1.msra.mxu0 0.0
    %83 = vmatprep.subr.mxu0 0.0
    %84 = vmatpush1.msra.mxu0 0.0
    %85 = vmatprep.subr.mxu0 0.0
    %86 = vmatpush1.msra.mxu0 0.0
    %87 = vmatprep.subr.mxu0 0.0
    %88 = vmatpush1.msra.mxu0 0.0
    %89 = vmatprep.subr.mxu0 0.0
    %90 = vmatpush1.msra.mxu0 0.0
    %91 = vmatprep.subr.mxu0 0.0
    %92 = vmatpush1.msra.mxu0 0.0
    %93 = vmatprep.subr.mxu0 0.0
    %94 = vmatpush1.msra.mxu0 0.0
    %95 = vmatprep.subr.mxu0 0.0
    %96 = vmatpush1.msra.mxu0 0.0
    %97 = vmatprep.subr.mxu0 0.0
    %98 = vmatpush1.msra.mxu0 0.0
    %99 = vmatprep.mubr.f32.mxu0 0.0
    %100 = vmatmul.mubr.f32.gmra.mrb[0].mxu0 %v33
    %v101 = vpop.f32.mrb[0].mxu0
    %v102 = vadd.f32 %v29, %v101
    %v103 = vpop.f32.mrb[0].mxu0
    %104 = vdwg.mxu0
    %vm105 = vcmask 261120
    %106 = vst.msk [vmem:[#allocation2] sm:$0xff] %vm105, %v102
    // Predicated region
    $region14: #{tpu_custom_call.1} parent=1 // pred_check
      _
    $region15: #{tpu_custom_call.1} parent=1 // pred_check_branch
      %108 = sbr.rel (0) target = $region17
    $region16: #{tpu_custom_call.1} parent=1 // pred_region
      %s110 = ssub.s32 128, 128
      %111 = vsyncadd [#allocation3], %s110
      %s113 = sshll.u32 [#allocation2], 4
      %s114 = int_to_ptr.vmem [resolvable:$true] %s113
      %116 = dma.vmem_to_hbm [thread:$0]  %s114, 128, %s3, [#allocation3]
    $region17: #{tpu_custom_call.1} parent=1 // pred_fallthru
      _
    // Predicated region
    $region18: #{tpu_custom_call.1} parent=1 // pred_check
      _
    $region19: #{tpu_custom_call.1} parent=1 // pred_check_branch
      %118 = sbr.rel (0) target = $region21
    $region20: #{tpu_custom_call.1} parent=1 // pred_region
      %119 = dma.done [#allocation3], 128
    $region21: #{tpu_custom_call.1} parent=1 // pred_fallthru
      _
    %120 = vsyncpa [#allocation3], 1

</llo_original>
